<compile_context>
chip_gen: v7x
topology: tpu7x:2x2x1
jax: 0.10.0
libtpu: 0.0.40
codegen_flags: <defaults>
</compile_context>

<pallas_src>
import jax
import jax.numpy as jnp
from jax.experimental import pallas as pl
from jax.experimental.pallas import tpu as pltpu


def mlp_kernel(x_ref, w1_ref, b1_ref, w2_ref, b2_ref, w3_ref, b3_ref,
               w4_ref, b4_ref, o_ref):
    # Whole 4-layer MLP (Linear->Tanh x3, then Linear) on one batch tile.
    # Matmuls accumulate in f32 on the MXU; tanh runs on the EUP in f32.
    x = x_ref[...].astype(jnp.float32)
    h = jnp.tanh(jnp.dot(x, w1_ref[...], preferred_element_type=jnp.float32)
                 + b1_ref[...])
    h = jnp.tanh(jnp.dot(h, w2_ref[...], preferred_element_type=jnp.float32)
                 + b2_ref[...])
    h = jnp.tanh(jnp.dot(h, w3_ref[...], preferred_element_type=jnp.float32)
                 + b3_ref[...])
    y = jnp.dot(h, w4_ref[...], preferred_element_type=jnp.float32) + b4_ref[...]
    o_ref[...] = y.astype(o_ref.dtype)


def network_forward(x, params, *, max_tile_rows=4096):
    """Pallas implementation of NETWORK.forward: 4-layer tanh MLP.

    The batch is tiled automatically:
      * batch <= max_tile_rows  -> single grid step (best on v5e/v6e).
      * batch  > max_tile_rows  -> multiple sublane-aligned tiles on a
        "parallel" grid axis (bounds VMEM/vreg pressure; v7x can shard
        tiles across its two TensorCores).
    """
    (w1, b1), (w2, b2), (w3, b3), (w4, b4) = params
    batch, in_put = x.shape
    hidden = w1.shape[1]
    out_put = w4.shape[1]
    out_dtype = jnp.result_type(x.dtype, w1.dtype)

    # Sublane-align the batch, then pick the tile size / grid extent.
    assert max_tile_rows % 8 == 0
    aligned_batch = ((batch + 7) // 8) * 8
    tile_b = min(aligned_batch, max_tile_rows)
    num_tiles = -(-aligned_batch // tile_b)          # ceil-div
    padded_batch = tile_b * num_tiles
    if padded_batch != batch:
        # Padded rows are computed and discarded (cheaper than a second path).
        x = jnp.pad(x, ((0, padded_batch - batch), (0, 0)))

    # Biases as (1, dim) rows so they broadcast cleanly inside the kernel.
    b1r = b1.reshape(1, hidden)
    b2r = b2.reshape(1, hidden)
    b3r = b3.reshape(1, hidden)
    b4r = b4.reshape(1, out_put)

    # Weights/biases: full-array blocks with constant index maps, so Pallas
    # keeps them resident in VMEM across grid steps (no re-DMA).
    def full(shape):
        return pl.BlockSpec(shape, lambda i: (0,) * len(shape))

    out = pl.pallas_call(
        mlp_kernel,
        out_shape=jax.ShapeDtypeStruct((padded_batch, out_put), out_dtype),
        grid_spec=pl.GridSpec(
            grid=(num_tiles,),
            in_specs=[
                pl.BlockSpec((tile_b, in_put), lambda i: (i, 0)),   # x tile
                full((in_put, hidden)), full((1, hidden)),          # layer 1
                full((hidden, hidden)), full((1, hidden)),          # layer 2
                full((hidden, hidden)), full((1, hidden)),          # layer 3
                full((hidden, out_put)), full((1, out_put)),        # layer 4
            ],
            out_specs=pl.BlockSpec((tile_b, out_put), lambda i: (i, 0)),
        ),
        compiler_params=pltpu.CompilerParams(
            dimension_semantics=("parallel",)),
    )(x, w1, b1r, w2, b2r, w3, b3r, w4, b4r)

    return out[:batch]


def init_linear(key, fan_in, fan_out, dtype=jnp.float32):
    # Mirrors torch.nn.Linear default init: U(-1/sqrt(fan_in), 1/sqrt(fan_in)).
    kw, kb = jax.random.split(key)
    bound = 1.0 / jnp.sqrt(jnp.array(fan_in, dtype))
    w = jax.random.uniform(kw, (fan_in, fan_out), dtype, -bound, bound)
    b = jax.random.uniform(kb, (fan_out,), dtype, -bound, bound)
    return w, b


if __name__ == "__main__":
    # PINN with proportional delay: scalar input t -> scalar output u(t).
    in_put, hidden, out_put = 1, 32, 1
    batch = 64

    key = jax.random.PRNGKey(0)
    k_x, k1, k2, k3, k4 = jax.random.split(key, 5)

    params = (
        init_linear(k1, in_put, hidden),
        init_linear(k2, hidden, hidden),
        init_linear(k3, hidden, hidden),
        init_linear(k4, hidden, out_put),
    )
    x = jax.random.uniform(k_x, (batch, in_put), jnp.float32)

    # Small batch -> single grid step (whole batch in one tile).
    # TODO(synk): the PINN residual/derivative evaluation around this forward
    # is not part of the module spec; fusing it here would amortize dispatch.
    y = network_forward(x, params)
    y = jax.block_until_ready(y)

    # Pure-JAX reference check of the same forward semantics.
    (w1, b1), (w2, b2), (w3, b3), (w4, b4) = params
    h = jnp.tanh(x @ w1 + b1)
    h = jnp.tanh(h @ w2 + b2)
    h = jnp.tanh(h @ w3 + b3)
    y_ref = h @ w4 + b4
    assert y.shape == (batch, out_put)
    assert jnp.allclose(y, y_ref, atol=1e-5, rtol=1e-5)

    print("KERNEL_OK")
</pallas_src>

<mosaic_0001>
module attributes {stable_mosaic.version = 11 : i64} {
  func.func @mlp_kernel(%arg0: i32, %arg1: memref<64x1xf32, #tpu.memory_space<vmem>>, %arg2: memref<1x32xf32, #tpu.memory_space<vmem>>, %arg3: memref<1x32xf32, #tpu.memory_space<vmem>>, %arg4: memref<32x32xf32, #tpu.memory_space<vmem>>, %arg5: memref<1x32xf32, #tpu.memory_space<vmem>>, %arg6: memref<32x32xf32, #tpu.memory_space<vmem>>, %arg7: memref<1x32xf32, #tpu.memory_space<vmem>>, %arg8: memref<32x1xf32, #tpu.memory_space<vmem>>, %arg9: memref<1x1xf32, #tpu.memory_space<vmem>>, %arg10: memref<64x1xf32, #tpu.memory_space<vmem>>) attributes {dimension_semantics = [#tpu.dimension_semantics<parallel>], iteration_bounds = array<i64: 1>, scalar_prefetch = 0 : i64, scratch_operands = 0 : i64, tpu.core_type = #tpu.core_type<tc>, window_params = [{transform_indices = @transform_0, window_bounds = array<i64: 64, 1>}, {pipeline_mode = #tpu.pipeline_mode<synchronous>, transform_indices = @transform_1, window_bounds = array<i64: 1, 32>}, {pipeline_mode = #tpu.pipeline_mode<synchronous>, transform_indices = @transform_2, window_bounds = array<i64: 1, 32>}, {pipeline_mode = #tpu.pipeline_mode<synchronous>, transform_indices = @transform_3, window_bounds = array<i64: 32, 32>}, {pipeline_mode = #tpu.pipeline_mode<synchronous>, transform_indices = @transform_4, window_bounds = array<i64: 1, 32>}, {pipeline_mode = #tpu.pipeline_mode<synchronous>, transform_indices = @transform_5, window_bounds = array<i64: 32, 32>}, {pipeline_mode = #tpu.pipeline_mode<synchronous>, transform_indices = @transform_6, window_bounds = array<i64: 1, 32>}, {pipeline_mode = #tpu.pipeline_mode<synchronous>, transform_indices = @transform_7, window_bounds = array<i64: 32, 1>}, {pipeline_mode = #tpu.pipeline_mode<synchronous>, transform_indices = @transform_8, window_bounds = array<i64: 1, 1>}, {transform_indices = @transform_9, window_bounds = array<i64: 64, 1>}]} {
    %c0 = arith.constant 0 : index
    %c0_0 = arith.constant 0 : index
    %0 = vector.load %arg1[%c0, %c0_0] : memref<64x1xf32, #tpu.memory_space<vmem>>, vector<64x1xf32>
    %c0_1 = arith.constant 0 : index
    %c0_2 = arith.constant 0 : index
    %1 = vector.load %arg2[%c0_1, %c0_2] : memref<1x32xf32, #tpu.memory_space<vmem>>, vector<1x32xf32>
    %cst = arith.constant dense<0.000000e+00> : vector<64x32xf32>
    %2 = tpu.matmul %0, %1, %cst {dimension_numbers = #tpu.dot_dimension_numbers<[1], [0], [0], [1], [0, 0, 1, 1], [], []>} : vector<64x1xf32>, vector<1x32xf32>, vector<64x32xf32> -> vector<64x32xf32>
    %c0_3 = arith.constant 0 : index
    %c0_4 = arith.constant 0 : index
    %3 = vector.load %arg3[%c0_3, %c0_4] : memref<1x32xf32, #tpu.memory_space<vmem>>, vector<1x32xf32>
    %4 = vector.broadcast %3 : vector<1x32xf32> to vector<64x32xf32>
    %5 = arith.addf %2, %4 : vector<64x32xf32>
    %6 = math.tanh %5 : vector<64x32xf32>
    %c0_5 = arith.constant 0 : index
    %c0_6 = arith.constant 0 : index
    %7 = vector.load %arg4[%c0_5, %c0_6] : memref<32x32xf32, #tpu.memory_space<vmem>>, vector<32x32xf32>
    %cst_7 = arith.constant dense<0.000000e+00> : vector<64x32xf32>
    %8 = tpu.matmul %6, %7, %cst_7 {dimension_numbers = #tpu.dot_dimension_numbers<[1], [0], [0], [1], [0, 0, 1, 1], [], []>} : vector<64x32xf32>, vector<32x32xf32>, vector<64x32xf32> -> vector<64x32xf32>
    %c0_8 = arith.constant 0 : index
    %c0_9 = arith.constant 0 : index
    %9 = vector.load %arg5[%c0_8, %c0_9] : memref<1x32xf32, #tpu.memory_space<vmem>>, vector<1x32xf32>
    %10 = vector.broadcast %9 : vector<1x32xf32> to vector<64x32xf32>
    %11 = arith.addf %8, %10 : vector<64x32xf32>
    %12 = math.tanh %11 : vector<64x32xf32>
    %c0_10 = arith.constant 0 : index
    %c0_11 = arith.constant 0 : index
    %13 = vector.load %arg6[%c0_10, %c0_11] : memref<32x32xf32, #tpu.memory_space<vmem>>, vector<32x32xf32>
    %cst_12 = arith.constant dense<0.000000e+00> : vector<64x32xf32>
    %14 = tpu.matmul %12, %13, %cst_12 {dimension_numbers = #tpu.dot_dimension_numbers<[1], [0], [0], [1], [0, 0, 1, 1], [], []>} : vector<64x32xf32>, vector<32x32xf32>, vector<64x32xf32> -> vector<64x32xf32>
    %c0_13 = arith.constant 0 : index
    %c0_14 = arith.constant 0 : index
    %15 = vector.load %arg7[%c0_13, %c0_14] : memref<1x32xf32, #tpu.memory_space<vmem>>, vector<1x32xf32>
    %16 = vector.broadcast %15 : vector<1x32xf32> to vector<64x32xf32>
    %17 = arith.addf %14, %16 : vector<64x32xf32>
    %18 = math.tanh %17 : vector<64x32xf32>
    %c0_15 = arith.constant 0 : index
    %c0_16 = arith.constant 0 : index
    %19 = vector.load %arg8[%c0_15, %c0_16] : memref<32x1xf32, #tpu.memory_space<vmem>>, vector<32x1xf32>
    %cst_17 = arith.constant dense<0.000000e+00> : vector<64x1xf32>
    %20 = tpu.matmul %18, %19, %cst_17 {dimension_numbers = #tpu.dot_dimension_numbers<[1], [0], [0], [1], [0, 0, 1, 1], [], []>} : vector<64x32xf32>, vector<32x1xf32>, vector<64x1xf32> -> vector<64x1xf32>
    %c0_18 = arith.constant 0 : index
    %c0_19 = arith.constant 0 : index
    %21 = vector.load %arg9[%c0_18, %c0_19] : memref<1x1xf32, #tpu.memory_space<vmem>>, vector<1x1xf32>
    %22 = vector.broadcast %21 : vector<1x1xf32> to vector<64x1xf32>
    %23 = arith.addf %20, %22 : vector<64x1xf32>
    %c0_20 = arith.constant 0 : index
    %c0_21 = arith.constant 0 : index
    %24 = vector.load %arg10[%c0_20, %c0_21] : memref<64x1xf32, #tpu.memory_space<vmem>>, vector<64x1xf32>
    tpu.vector_store %arg10[%c0_20, %c0_21], %23 {strides = array<i32>} : memref<64x1xf32, #tpu.memory_space<vmem>>, vector<64x1xf32>,
    return
  }
  func.func @transform_0(%arg0: i32) -> (i32, i32) {
    %c0_i32 = arith.constant 0 : i32
    %c0_i32_0 = arith.constant 0 : i32
    return %arg0, %c0_i32 : i32, i32
  }
  func.func @transform_1(%arg0: i32) -> (i32, i32) {
    %c0_i32 = arith.constant 0 : i32
    %c0_i32_0 = arith.constant 0 : i32
    %c0_i32_1 = arith.constant 0 : i32
    return %c0_i32, %c0_i32_0 : i32, i32
  }
  func.func @transform_2(%arg0: i32) -> (i32, i32) {
    %c0_i32 = arith.constant 0 : i32
    %c0_i32_0 = arith.constant 0 : i32
    %c0_i32_1 = arith.constant 0 : i32
    return %c0_i32, %c0_i32_0 : i32, i32
  }
  func.func @transform_3(%arg0: i32) -> (i32, i32) {
    %c0_i32 = arith.constant 0 : i32
    %c0_i32_0 = arith.constant 0 : i32
    %c0_i32_1 = arith.constant 0 : i32
    return %c0_i32, %c0_i32_0 : i32, i32
  }
  func.func @transform_4(%arg0: i32) -> (i32, i32) {
    %c0_i32 = arith.constant 0 : i32
    %c0_i32_0 = arith.constant 0 : i32
    %c0_i32_1 = arith.constant 0 : i32
    return %c0_i32, %c0_i32_0 : i32, i32
  }
  func.func @transform_5(%arg0: i32) -> (i32, i32) {
    %c0_i32 = arith.constant 0 : i32
    %c0_i32_0 = arith.constant 0 : i32
    %c0_i32_1 = arith.constant 0 : i32
    return %c0_i32, %c0_i32_0 : i32, i32
  }
  func.func @transform_6(%arg0: i32) -> (i32, i32) {
    %c0_i32 = arith.constant 0 : i32
    %c0_i32_0 = arith.constant 0 : i32
    %c0_i32_1 = arith.constant 0 : i32
    return %c0_i32, %c0_i32_0 : i32, i32
  }
  func.func @transform_7(%arg0: i32) -> (i32, i32) {
    %c0_i32 = arith.constant 0 : i32
    %c0_i32_0 = arith.constant 0 : i32
    %c0_i32_1 = arith.constant 0 : i32
    return %c0_i32, %c0_i32_0 : i32, i32
  }
  func.func @transform_8(%arg0: i32) -> (i32, i32) {
    %c0_i32 = arith.constant 0 : i32
    %c0_i32_0 = arith.constant 0 : i32
    %c0_i32_1 = arith.constant 0 : i32
    return %c0_i32, %c0_i32_0 : i32, i32
  }
  func.func @transform_9(%arg0: i32) -> (i32, i32) {
    %c0_i32 = arith.constant 0 : i32
    %c0_i32_0 = arith.constant 0 : i32
    return %arg0, %c0_i32 : i32, i32
  }
}

</mosaic_0001>

<llo_original>
// kernel: tpu_custom_call.1
$region0: #{tpu_custom_call.1}
  #allocation0 [shape = 'u32[]', space=smem, size = 0x4, offset = 0x4, fixed_abs, tag = 'smem constant byte address 0x4 - core index']
  #allocation1 [shape = 'u32[144,128]{1,0:T(1,128)}', space=vmem, size = 0x12000, scoped, tag = 'internal scratch']
  #allocation2 [shape = 'f32[1,1]{1,0:T(1,128)S(1)}', space=vmem, size = 0x200, scoped, tag = 'scoped memory for tpu_custom_call.1']
  %s0 = inlined_call_operand.vmem [shape: f32[64,1], index: 0, kind: input, shape index: {}]
  %s1 = inlined_call_operand.vmem [shape: f32[1,32], index: 1, kind: input, shape index: {}]
  %s2 = inlined_call_operand.vmem [shape: f32[1,32], index: 2, kind: input, shape index: {}]
  %s3 = inlined_call_operand.vmem [shape: f32[32,32], index: 3, kind: input, shape index: {}]
  %s4 = inlined_call_operand.vmem [shape: f32[1,32], index: 4, kind: input, shape index: {}]
  %s5 = inlined_call_operand.vmem [shape: f32[32,32], index: 5, kind: input, shape index: {}]
  %s6 = inlined_call_operand.vmem [shape: f32[1,32], index: 6, kind: input, shape index: {}]
  %s7 = inlined_call_operand.vmem [shape: f32[32,1], index: 7, kind: input, shape index: {}]
  %s8 = inlined_call_operand.<no memory space> [shape: f32[1,1], index: 8, kind: input, shape index: {}]
  %s9 = inlined_call_operand.vmem [shape: f32[64,1], index: 9, kind: output, shape index: {}]
  %s10 = sld [smem:[#allocation0]]
  $region46: #{tpu_custom_call.1} parent=0
    _
  %s12 = ssub.s32 1, %s10
  %s13 = scalar_select 0, %s12, %s10
  %v14 = vstv %s8
  %15 = vst [vmem:[#allocation2] sm:$0x1] %v14
  // Predicated region
  $region2: #{tpu_custom_call.1} parent=0 // pred_check
    _
  $region3: #{tpu_custom_call.1} parent=0 // pred_check_branch
    %17 = sbr.rel (0) target = $region5
  $region4: #{tpu_custom_call.1} parent=0 // pred_region
    _
  $region5: #{tpu_custom_call.1} parent=0 // pred_fallthru
    _
  // Predicated region
  $region6: #{tpu_custom_call.1} parent=0 // pred_check
    _
  $region7: #{tpu_custom_call.1} parent=0 // pred_check_branch
    %19 = sbr.rel (0) target = $region9
  $region8: #{tpu_custom_call.1} parent=0 // pred_region
    _
  $region9: #{tpu_custom_call.1} parent=0 // pred_fallthru
    _
  // Predicated region
  $region10: #{tpu_custom_call.1} parent=0 // pred_check
    _
  $region11: #{tpu_custom_call.1} parent=0 // pred_check_branch
    %21 = sbr.rel (0) target = $region13
  $region12: #{tpu_custom_call.1} parent=0 // pred_region
    _
  $region13: #{tpu_custom_call.1} parent=0 // pred_fallthru
    _
  // Predicated region
  $region14: #{tpu_custom_call.1} parent=0 // pred_check
    _
  $region15: #{tpu_custom_call.1} parent=0 // pred_check_branch
    %23 = sbr.rel (0) target = $region17
  $region16: #{tpu_custom_call.1} parent=0 // pred_region
    _
  $region17: #{tpu_custom_call.1} parent=0 // pred_fallthru
    _
  // Predicated region
  $region18: #{tpu_custom_call.1} parent=0 // pred_check
    _
  $region19: #{tpu_custom_call.1} parent=0 // pred_check_branch
    %25 = sbr.rel (0) target = $region21
  $region20: #{tpu_custom_call.1} parent=0 // pred_region
    _
  $region21: #{tpu_custom_call.1} parent=0 // pred_fallthru
    _
  // Predicated region
  $region22: #{tpu_custom_call.1} parent=0 // pred_check
    _
  $region23: #{tpu_custom_call.1} parent=0 // pred_check_branch
    %27 = sbr.rel (0) target = $region25
  $region24: #{tpu_custom_call.1} parent=0 // pred_region
    _
  $region25: #{tpu_custom_call.1} parent=0 // pred_fallthru
    _
  // Predicated region
  $region26: #{tpu_custom_call.1} parent=0 // pred_check
    _
  $region27: #{tpu_custom_call.1} parent=0 // pred_check_branch
    %29 = sbr.rel (0) target = $region29
  $region28: #{tpu_custom_call.1} parent=0 // pred_region
    _
  $region29: #{tpu_custom_call.1} parent=0 // pred_fallthru
    _
  // Predicated region
  $region30: #{tpu_custom_call.1} parent=0 // pred_check
    _
  $region31: #{tpu_custom_call.1} parent=0 // pred_check_branch
    %31 = sbr.rel (0) target = $region33
  $region32: #{tpu_custom_call.1} parent=0 // pred_region
    _
  $region33: #{tpu_custom_call.1} parent=0 // pred_fallthru
    _
  // Predicated region
  $region34: #{tpu_custom_call.1} parent=0 // pred_check
    _
  $region35: #{tpu_custom_call.1} parent=0 // pred_check_branch
    %33 = sbr.rel (0) target = $region37
  $region36: #{tpu_custom_call.1} parent=0 // pred_region
    _
  $region37: #{tpu_custom_call.1} parent=0 // pred_fallthru
    _
  %v34 = vld [vmem:[%s0] sm:$0xff]
  %v35 = vld [vmem:[%s0 + $0x8] sm:$0xff]
  %v36 = vld [vmem:[%s0 + $0x10] sm:$0xff]
  %v37 = vld [vmem:[%s0 + $0x18] sm:$0xff]
  %v38 = vld [vmem:[%s0 + $0x20] sm:$0xff]
  %v39 = vld [vmem:[%s0 + $0x28] sm:$0xff]
  %v40 = vld [vmem:[%s0 + $0x30] sm:$0xff]
  %v41 = vld [vmem:[%s0 + $0x38] sm:$0xff]
  %v42 = vld [vmem:[%s1] sm:$0x1]
  %v43 = vld [vmem:[%s2] sm:$0x1]
  %v45 = vlaneseq
  %v46 = vshrl.u32 %v45, 7
  %v47 = vsub.s32 0, %v46
  %v48 = vrot.slane %v43, %v47
  %vm50 = vcmask 7168
  %v52 = vsel %vm50, %v34, 0
  %v55 = vsel %vm50, %v35, 0
  %v58 = vsel %vm50, %v36, 0
  %v61 = vsel %vm50, %v37, 0
  %v64 = vsel %vm50, %v38, 0
  %v67 = vsel %vm50, %v39, 0
  %v70 = vsel %vm50, %v40, 0
  %v73 = vsel %vm50, %v41, 0
  %vm75 = vcmask 1040384
  %v77 = vsel %vm75, %v42, 0
  %79 = vmatprep.subr.mxu0 0.0
  %80 = vmatpush1.msra.mxu0 %v77
  %81 = vmatprep.subr.mxu0 0.0
  %82 = vmatpush1.msra.mxu0 0.0
  %83 = vmatprep.subr.mxu0 0.0
  %84 = vmatpush1.msra.mxu0 0.0
  %85 = vmatprep.subr.mxu0 0.0
  %86 = vmatpush1.msra.mxu0 0.0
  %87 = vmatprep.subr.mxu0 0.0
  %88 = vmatpush1.msra.mxu0 0.0
  %89 = vmatprep.subr.mxu0 0.0
  %90 = vmatpush1.msra.mxu0 0.0
  %91 = vmatprep.subr.mxu0 0.0
  %92 = vmatpush1.msra.mxu0 0.0
  %93 = vmatprep.subr.mxu0 0.0
  %94 = vmatpush1.msra.mxu0 0.0
  %95 = vmatprep.subr.mxu0 0.0
  %96 = vmatpush1.msra.mxu0 0.0
  %97 = vmatprep.subr.mxu0 0.0
  %98 = vmatpush1.msra.mxu0 0.0
  %99 = vmatprep.subr.mxu0 0.0
  %100 = vmatpush1.msra.mxu0 0.0
  %101 = vmatprep.subr.mxu0 0.0
  %102 = vmatpush1.msra.mxu0 0.0
  %103 = vmatprep.subr.mxu0 0.0
  %104 = vmatpush1.msra.mxu0 0.0
  %105 = vmatprep.subr.mxu0 0.0
  %106 = vmatpush1.msra.mxu0 0.0
  %107 = vmatprep.subr.mxu0 0.0
  %108 = vmatpush1.msra.mxu0 0.0
  %109 = vmatprep.subr.mxu0 0.0
  %110 = vmatpush1.msra.mxu0 0.0
  %111 = vmatprep.subr.mxu0 0.0
  %112 = vmatpush1.msra.mxu0 0.0
  %113 = vmatprep.subr.mxu0 0.0
  %114 = vmatpush1.msra.mxu0 0.0
  %115 = vmatprep.subr.mxu0 0.0
  %116 = vmatpush1.msra.mxu0 0.0
  %117 = vmatprep.subr.mxu0 0.0
  %118 = vmatpush1.msra.mxu0 0.0
  %119 = vmatprep.subr.mxu0 0.0
  %120 = vmatpush1.msra.mxu0 0.0
  %121 = vmatprep.subr.mxu0 0.0
  %122 = vmatpush1.msra.mxu0 0.0
  %123 = vmatprep.subr.mxu0 0.0
  %124 = vmatpush1.msra.mxu0 0.0
  %125 = vmatprep.subr.mxu0 0.0
  %126 = vmatpush1.msra.mxu0 0.0
  %127 = vmatprep.subr.mxu0 0.0
  %128 = vmatpush1.msra.mxu0 0.0
  %129 = vmatprep.subr.mxu0 0.0
  %130 = vmatpush1.msra.mxu0 0.0
  %131 = vmatprep.subr.mxu0 0.0
  %132 = vmatpush1.msra.mxu0 0.0
  %133 = vmatprep.subr.mxu0 0.0
  %134 = vmatpush1.msra.mxu0 0.0
  %135 = vmatprep.subr.mxu0 0.0
  %136 = vmatpush1.msra.mxu0 0.0
  %137 = vmatprep.subr.mxu0 0.0
  %138 = vmatpush1.msra.mxu0 0.0
  %139 = vmatprep.subr.mxu0 0.0
  %140 = vmatpush1.msra.mxu0 0.0
  %141 = vmatprep.subr.mxu0 0.0
  %142 = vmatpush1.msra.mxu0 0.0
  %143 = vmatprep.mubr.f32.mxu0 0.0
  %144 = vmatmul.mubr.f32.gmra.mrb[0].mxu0 %v52
  %v145 = vpop.f32.mrb[0].mxu0
  %v146 = vadd.f32 %v48, %v145
  %v147 = vpop.f32.mrb[0].mxu0
  %148 = vmatprep.mubr.f32.mxu0 0.0
  %149 = vmatmul.mubr.f32.gmra.mrb[0].mxu0 %v55
  %v150 = vpop.f32.mrb[0].mxu0
  %v151 = vadd.f32 %v48, %v150
  %v152 = vpop.f32.mrb[0].mxu0
  %153 = vmatprep.mubr.f32.mxu0 0.0
  %154 = vmatmul.mubr.f32.gmra.mrb[0].mxu0 %v58
  %v155 = vpop.f32.mrb[0].mxu0
  %v156 = vadd.f32 %v48, %v155
  %v157 = vpop.f32.mrb[0].mxu0
  %158 = vmatprep.mubr.f32.mxu0 0.0
  %159 = vmatmul.mubr.f32.gmra.mrb[0].mxu0 %v61
  %v160 = vpop.f32.mrb[0].mxu0
  %v161 = vadd.f32 %v48, %v160
  %v162 = vpop.f32.mrb[0].mxu0
  %163 = vmatprep.mubr.f32.mxu0 0.0
  %164 = vmatmul.mubr.f32.gmra.mrb[0].mxu0 %v64
  %v165 = vpop.f32.mrb[0].mxu0
  %v166 = vadd.f32 %v48, %v165
  %v167 = vpop.f32.mrb[0].mxu0
  %168 = vmatprep.mubr.f32.mxu0 0.0
  %169 = vmatmul.mubr.f32.gmra.mrb[0].mxu0 %v67
  %v170 = vpop.f32.mrb[0].mxu0
  %v171 = vadd.f32 %v48, %v170
  %v172 = vpop.f32.mrb[0].mxu0
  %173 = vmatprep.mubr.f32.mxu0 0.0
  %174 = vmatmul.mubr.f32.gmra.mrb[0].mxu0 %v70
  %v175 = vpop.f32.mrb[0].mxu0
  %v176 = vadd.f32 %v48, %v175
  %v177 = vpop.f32.mrb[0].mxu0
  %178 = vmatprep.mubr.f32.mxu0 0.0
  %179 = vmatmul.mubr.f32.gmra.mrb[0].mxu0 %v73
  %v180 = vpop.f32.mrb[0].mxu0
  %v181 = vadd.f32 %v48, %v180
  %v182 = vpop.f32.mrb[0].mxu0
  %183 = vdwg.mxu0
  %v184 = vtanh.pop %v146
  %v185 = vtanh.pop %v151
  %v186 = vtanh.pop %v156
  %v187 = vtanh.pop %v161
  %v188 = vtanh.pop %v166
  %v189 = vtanh.pop %v171
  %v190 = vtanh.pop %v176
  %v191 = vtanh.pop %v181
  %v192 = vld [vmem:[%s3] sm:$0xff]
  %v193 = vld [vmem:[%s3 + $0x8] sm:$0xff]
  %v194 = vld [vmem:[%s3 + $0x10] sm:$0xff]
  %v195 = vld [vmem:[%s3 + $0x18] sm:$0xff]
  %v196 = vld [vmem:[%s4] sm:$0x1]
  %v198 = vlaneseq
  %v199 = vshrl.u32 %v198, 7
  %v200 = vsub.s32 0, %v199
  %v201 = vrot.slane %v196, %v200
  %vm203 = vcmask 261120
  %v205 = vsel %vm203, %v184, 0
  %v208 = vsel %vm203, %v185, 0
  %v211 = vsel %vm203, %v186, 0
  %v214 = vsel %vm203, %v187, 0
  %v217 = vsel %vm203, %v188, 0
  %v220 = vsel %vm203, %v189, 0
  %v223 = vsel %vm203, %v190, 0
  %v226 = vsel %vm203, %v191, 0
  %228 = vmatprep.subr.mxu0 0.0
  %229 = vmatpush1.msra.mxu0 %v192
  %230 = vmatprep.subr.mxu0 0.0
  %231 = vmatpush1.msra.mxu0 %v193
  %232 = vmatprep.subr.mxu0 0.0
  %233 = vmatpush1.msra.mxu0 %v194
  %234 = vmatprep.subr.mxu0 0.0
  %235 = vmatpush1.msra.mxu0 %v195
  %236 = vmatprep.subr.mxu0 0.0
  %237 = vmatpush1.msra.mxu0 0.0
  %238 = vmatprep.subr.mxu0 0.0
  %239 = vmatpush1.msra.mxu0 0.0
  %240 = vmatprep.subr.mxu0 0.0
  %241 = vmatpush1.msra.mxu0 0.0
  %242 = vmatprep.subr.mxu0 0.0
  %243 = vmatpush1.msra.mxu0 0.0
  %244 = vmatprep.subr.mxu0 0.0
  %245 = vmatpush1.msra.mxu0 0.0
  %246 = vmatprep.subr.mxu0 0.0
  %247 = vmatpush1.msra.mxu0 0.0
  %248 = vmatprep.subr.mxu0 0.0
  %249 = vmatpush1.msra.mxu0 0.0
  %250 = vmatprep.subr.mxu0 0.0
  %251 = vmatpush1.msra.mxu0 0.0
  %252 = vmatprep.subr.mxu0 0.0
  %253 = vmatpush1.msra.mxu0 0.0
  %254 = vmatprep.subr.mxu0 0.0
  %255 = vmatpush1.msra.mxu0 0.0
  %256 = vmatprep.subr.mxu0 0.0
  %257 = vmatpush1.msra.mxu0 0.0
  %258 = vmatprep.subr.mxu0 0.0
  %259 = vmatpush1.msra.mxu0 0.0
  %260 = vmatprep.subr.mxu0 0.0
  %261 = vmatpush1.msra.mxu0 0.0
  %262 = vmatprep.subr.mxu0 0.0
  %263 = vmatpush1.msra.mxu0 0.0
  %264 = vmatprep.subr.mxu0 0.0
  %265 = vmatpush1.msra.mxu0 0.0
  %266 = vmatprep.subr.mxu0 0.0
  %267 = vmatpush1.msra.mxu0 0.0
  %268 = vmatprep.subr.mxu0 0.0
  %269 = vmatpush1.msra.mxu0 0.0
  %270 = vmatprep.subr.mxu0 0.0
  %271 = vmatpush1.msra.mxu0 0.0
  %272 = vmatprep.subr.mxu0 0.0
  %273 = vmatpush1.msra.mxu0 0.0
  %274 = vmatprep.subr.mxu0 0.0
  %275 = vmatpush1.msra.mxu0 0.0
  %276 = vmatprep.subr.mxu0 0.0
  %277 = vmatpush1.msra.mxu0 0.0
  %278 = vmatprep.subr.mxu0 0.0
  %279 = vmatpush1.msra.mxu0 0.0
  %280 = vmatprep.subr.mxu0 0.0
  %281 = vmatpush1.msra.mxu0 0.0
  %282 = vmatprep.subr.mxu0 0.0
  %283 = vmatpush1.msra.mxu0 0.0
  %284 = vmatprep.subr.mxu0 0.0
  %285 = vmatpush1.msra.mxu0 0.0
  %286 = vmatprep.subr.mxu0 0.0
  %287 = vmatpush1.msra.mxu0 0.0
  %288 = vmatprep.subr.mxu0 0.0
  %289 = vmatpush1.msra.mxu0 0.0
  %290 = vmatprep.subr.mxu0 0.0
  %291 = vmatpush1.msra.mxu0 0.0
  %292 = vmatprep.mubr.f32.mxu0 0.0
  %293 = vmatmul.mubr.f32.gmra.mrb[0].mxu0 %v205
  %v294 = vpop.f32.mrb[0].mxu0
  %v295 = vadd.f32 %v201, %v294
  %v296 = vpop.f32.mrb[0].mxu0
  %297 = vmatprep.mubr.f32.mxu0 0.0
  %298 = vmatmul.mubr.f32.gmra.mrb[0].mxu0 %v208
  %v299 = vpop.f32.mrb[0].mxu0
  %v300 = vadd.f32 %v201, %v299
  %v301 = vpop.f32.mrb[0].mxu0
  %302 = vmatprep.mubr.f32.mxu0 0.0
  %303 = vmatmul.mubr.f32.gmra.mrb[0].mxu0 %v211
  %v304 = vpop.f32.mrb[0].mxu0
  %v305 = vadd.f32 %v201, %v304
  %v306 = vpop.f32.mrb[0].mxu0
  %307 = vmatprep.mubr.f32.mxu0 0.0
  %308 = vmatmul.mubr.f32.gmra.mrb[0].mxu0 %v214
  %v309 = vpop.f32.mrb[0].mxu0
  %v310 = vadd.f32 %v201, %v309
  %v311 = vpop.f32.mrb[0].mxu0
  %312 = vmatprep.mubr.f32.mxu0 0.0
  %313 = vmatmul.mubr.f32.gmra.mrb[0].mxu0 %v217
  %v314 = vpop.f32.mrb[0].mxu0
  %v315 = vadd.f32 %v201, %v314
  %v316 = vpop.f32.mrb[0].mxu0
  %317 = vmatprep.mubr.f32.mxu0 0.0
  %318 = vmatmul.mubr.f32.gmra.mrb[0].mxu0 %v220
  %v319 = vpop.f32.mrb[0].mxu0
  %v320 = vadd.f32 %v201, %v319
  %v321 = vpop.f32.mrb[0].mxu0
  %322 = vmatprep.mubr.f32.mxu0 0.0
  %323 = vmatmul.mubr.f32.gmra.mrb[0].mxu0 %v223
  %v324 = vpop.f32.mrb[0].mxu0
  %v325 = vadd.f32 %v201, %v324
  %v326 = vpop.f32.mrb[0].mxu0
  %327 = vmatprep.mubr.f32.mxu0 0.0
  %328 = vmatmul.mubr.f32.gmra.mrb[0].mxu0 %v226
  %v329 = vpop.f32.mrb[0].mxu0
  %v330 = vadd.f32 %v201, %v329
  %v331 = vpop.f32.mrb[0].mxu0
  %332 = vdwg.mxu0
  %v333 = vtanh.pop %v295
  %v334 = vtanh.pop %v300
  %v335 = vtanh.pop %v305
  %v336 = vtanh.pop %v310
  %v337 = vtanh.pop %v315
  %v338 = vtanh.pop %v320
  %v339 = vtanh.pop %v325
  %v340 = vtanh.pop %v330
  %v341 = vld [vmem:[%s5] sm:$0xff]
  %v342 = vld [vmem:[%s5 + $0x8] sm:$0xff]
  %v343 = vld [vmem:[%s5 + $0x10] sm:$0xff]
  %v344 = vld [vmem:[%s5 + $0x18] sm:$0xff]
  %v345 = vld [vmem:[%s6] sm:$0x1]
  %v347 = vlaneseq
  %v348 = vshrl.u32 %v347, 7
  %v349 = vsub.s32 0, %v348
  %v350 = vrot.slane %v345, %v349
  %v353 = vsel %vm203, %v333, 0
  %v356 = vsel %vm203, %v334, 0
  %v359 = vsel %vm203, %v335, 0
  %v362 = vsel %vm203, %v336, 0
  %v365 = vsel %vm203, %v337, 0
  %v368 = vsel %vm203, %v338, 0
  %v371 = vsel %vm203, %v339, 0
  %v374 = vsel %vm203, %v340, 0
  %376 = vmatprep.subr.mxu0 0.0
  %377 = vmatpush1.msra.mxu0 %v341
  %378 = vmatprep.subr.mxu0 0.0
  %379 = vmatpush1.msra.mxu0 %v342
  %380 = vmatprep.subr.mxu0 0.0
  %381 = vmatpush1.msra.mxu0 %v343
  %382 = vmatprep.subr.mxu0 0.0
  %383 = vmatpush1.msra.mxu0 %v344
  %384 = vmatprep.subr.mxu0 0.0
  %385 = vmatpush1.msra.mxu0 0.0
  %386 = vmatprep.subr.mxu0 0.0
  %387 = vmatpush1.msra.mxu0 0.0
  %388 = vmatprep.subr.mxu0 0.0
  %389 = vmatpush1.msra.mxu0 0.0
  %390 = vmatprep.subr.mxu0 0.0
  %391 = vmatpush1.msra.mxu0 0.0
  %392 = vmatprep.subr.mxu0 0.0
  %393 = vmatpush1.msra.mxu0 0.0
  %394 = vmatprep.subr.mxu0 0.0
  %395 = vmatpush1.msra.mxu0 0.0
  %396 = vmatprep.subr.mxu0 0.0
  %397 = vmatpush1.msra.mxu0 0.0
  %398 = vmatprep.subr.mxu0 0.0
  %399 = vmatpush1.msra.mxu0 0.0
  %400 = vmatprep.subr.mxu0 0.0
  %401 = vmatpush1.msra.mxu0 0.0
  %402 = vmatprep.subr.mxu0 0.0
  %403 = vmatpush1.msra.mxu0 0.0
  %404 = vmatprep.subr.mxu0 0.0
  %405 = vmatpush1.msra.mxu0 0.0
  %406 = vmatprep.subr.mxu0 0.0
  %407 = vmatpush1.msra.mxu0 0.0
  %408 = vmatprep.subr.mxu0 0.0
  %409 = vmatpush1.msra.mxu0 0.0
  %410 = vmatprep.subr.mxu0 0.0
  %411 = vmatpush1.msra.mxu0 0.0
  %412 = vmatprep.subr.mxu0 0.0
  %413 = vmatpush1.msra.mxu0 0.0
  %414 = vmatprep.subr.mxu0 0.0
  %415 = vmatpush1.msra.mxu0 0.0
  %416 = vmatprep.subr.mxu0 0.0
  %417 = vmatpush1.msra.mxu0 0.0
  %418 = vmatprep.subr.mxu0 0.0
  %419 = vmatpush1.msra.mxu0 0.0
  %420 = vmatprep.subr.mxu0 0.0
  %421 = vmatpush1.msra.mxu0 0.0
  %422 = vmatprep.subr.mxu0 0.0
  %423 = vmatpush1.msra.mxu0 0.0
  %424 = vmatprep.subr.mxu0 0.0
  %425 = vmatpush1.msra.mxu0 0.0
  %426 = vmatprep.subr.mxu0 0.0
  %427 = vmatpush1.msra.mxu0 0.0
  %428 = vmatprep.subr.mxu0 0.0
  %429 = vmatpush1.msra.mxu0 0.0
  %430 = vmatprep.subr.mxu0 0.0
  %431 = vmatpush1.msra.mxu0 0.0
  %432 = vmatprep.subr.mxu0 0.0
  %433 = vmatpush1.msra.mxu0 0.0
  %434 = vmatprep.subr.mxu0 0.0
  %435 = vmatpush1.msra.mxu0 0.0
  %436 = vmatprep.subr.mxu0 0.0
  %437 = vmatpush1.msra.mxu0 0.0
  %438 = vmatprep.subr.mxu0 0.0
  %439 = vmatpush1.msra.mxu0 0.0
  %440 = vmatprep.mubr.f32.mxu0 0.0
  %441 = vmatmul.mubr.f32.gmra.mrb[0].mxu0 %v353
  %v442 = vpop.f32.mrb[0].mxu0
  %v443 = vadd.f32 %v350, %v442
  %v444 = vpop.f32.mrb[0].mxu0
  %445 = vmatprep.mubr.f32.mxu0 0.0
  %446 = vmatmul.mubr.f32.gmra.mrb[0].mxu0 %v356
  %v447 = vpop.f32.mrb[0].mxu0
  %v448 = vadd.f32 %v350, %v447
  %v449 = vpop.f32.mrb[0].mxu0
  %450 = vmatprep.mubr.f32.mxu0 0.0
  %451 = vmatmul.mubr.f32.gmra.mrb[0].mxu0 %v359
  %v452 = vpop.f32.mrb[0].mxu0
  %v453 = vadd.f32 %v350, %v452
  %v454 = vpop.f32.mrb[0].mxu0
  %455 = vmatprep.mubr.f32.mxu0 0.0
  %456 = vmatmul.mubr.f32.gmra.mrb[0].mxu0 %v362
  %v457 = vpop.f32.mrb[0].mxu0
  %v458 = vadd.f32 %v350, %v457
  %v459 = vpop.f32.mrb[0].mxu0
  %460 = vmatprep.mubr.f32.mxu0 0.0
  %461 = vmatmul.mubr.f32.gmra.mrb[0].mxu0 %v365
  %v462 = vpop.f32.mrb[0].mxu0
  %v463 = vadd.f32 %v350, %v462
  %v464 = vpop.f32.mrb[0].mxu0
  %465 = vmatprep.mubr.f32.mxu0 0.0
  %466 = vmatmul.mubr.f32.gmra.mrb[0].mxu0 %v368
  %v467 = vpop.f32.mrb[0].mxu0
  %v468 = vadd.f32 %v350, %v467
  %v469 = vpop.f32.mrb[0].mxu0
  %470 = vmatprep.mubr.f32.mxu0 0.0
  %471 = vmatmul.mubr.f32.gmra.mrb[0].mxu0 %v371
  %v472 = vpop.f32.mrb[0].mxu0
  %v473 = vadd.f32 %v350, %v472
  %v474 = vpop.f32.mrb[0].mxu0
  %475 = vmatprep.mubr.f32.mxu0 0.0
  %476 = vmatmul.mubr.f32.gmra.mrb[0].mxu0 %v374
  %v477 = vpop.f32.mrb[0].mxu0
  %v478 = vadd.f32 %v350, %v477
  %v479 = vpop.f32.mrb[0].mxu0
  %480 = vdwg.mxu0
  %v481 = vtanh.pop %v443
  %v482 = vtanh.pop %v448
  %v483 = vtanh.pop %v453
  %v484 = vtanh.pop %v458
  %v485 = vtanh.pop %v463
  %v486 = vtanh.pop %v468
  %v487 = vtanh.pop %v473
  %v488 = vtanh.pop %v478
  %v489 = vld [vmem:[%s7] sm:$0xff]
  %v490 = vld [vmem:[%s7 + $0x8] sm:$0xff]
  %v491 = vld [vmem:[%s7 + $0x10] sm:$0xff]
  %v492 = vld [vmem:[%s7 + $0x18] sm:$0xff]
  %v493 = vld [vmem:[#allocation2] sm:$0x1]
  %v495 = vlaneseq
  %v496 = vshrl.u32 %v495, 7
  %v497 = vsub.s32 0, %v496
  %v498 = vrot.slane %v493, %v497
  %v501 = vsel %vm203, %v481, 0
  %v504 = vsel %vm203, %v482, 0
  %v507 = vsel %vm203, %v483, 0
  %v510 = vsel %vm203, %v484, 0
  %v513 = vsel %vm203, %v485, 0
  %v516 = vsel %vm203, %v486, 0
  %v519 = vsel %vm203, %v487, 0
  %v522 = vsel %vm203, %v488, 0
  %524 = vmatprep.subr.mxu0 0.0
  %525 = vmatpush1.msra.mxu0 %v489
  %526 = vmatprep.subr.mxu0 0.0
  %527 = vmatpush1.msra.mxu0 %v490
  %528 = vmatprep.subr.mxu0 0.0
  %529 = vmatpush1.msra.mxu0 %v491
  %530 = vmatprep.subr.mxu0 0.0
  %531 = vmatpush1.msra.mxu0 %v492
  %532 = vmatprep.subr.mxu0 0.0
  %533 = vmatpush1.msra.mxu0 0.0
  %534 = vmatprep.subr.mxu0 0.0
  %535 = vmatpush1.msra.mxu0 0.0
  %536 = vmatprep.subr.mxu0 0.0
  %537 = vmatpush1.msra.mxu0 0.0
  %538 = vmatprep.subr.mxu0 0.0
  %539 = vmatpush1.msra.mxu0 0.0
  %540 = vmatprep.subr.mxu0 0.0
  %541 = vmatpush1.msra.mxu0 0.0
  %542 = vmatprep.subr.mxu0 0.0
  %543 = vmatpush1.msra.mxu0 0.0
  %544 = vmatprep.subr.mxu0 0.0
  %545 = vmatpush1.msra.mxu0 0.0
  %546 = vmatprep.subr.mxu0 0.0
  %547 = vmatpush1.msra.mxu0 0.0
  %548 = vmatprep.subr.mxu0 0.0
  %549 = vmatpush1.msra.mxu0 0.0
  %550 = vmatprep.subr.mxu0 0.0
  %551 = vmatpush1.msra.mxu0 0.0
  %552 = vmatprep.subr.mxu0 0.0
  %553 = vmatpush1.msra.mxu0 0.0
  %554 = vmatprep.subr.mxu0 0.0
  %555 = vmatpush1.msra.mxu0 0.0
  %556 = vmatprep.subr.mxu0 0.0
  %557 = vmatpush1.msra.mxu0 0.0
  %558 = vmatprep.subr.mxu0 0.0
  %559 = vmatpush1.msra.mxu0 0.0
  %560 = vmatprep.subr.mxu0 0.0
  %561 = vmatpush1.msra.mxu0 0.0
  %562 = vmatprep.subr.mxu0 0.0
  %563 = vmatpush1.msra.mxu0 0.0
  %564 = vmatprep.subr.mxu0 0.0
  %565 = vmatpush1.msra.mxu0 0.0
  %566 = vmatprep.subr.mxu0 0.0
  %567 = vmatpush1.msra.mxu0 0.0
  %568 = vmatprep.subr.mxu0 0.0
  %569 = vmatpush1.msra.mxu0 0.0
  %570 = vmatprep.subr.mxu0 0.0
  %571 = vmatpush1.msra.mxu0 0.0
  %572 = vmatprep.subr.mxu0 0.0
  %573 = vmatpush1.msra.mxu0 0.0
  %574 = vmatprep.subr.mxu0 0.0
  %575 = vmatpush1.msra.mxu0 0.0
  %576 = vmatprep.subr.mxu0 0.0
  %577 = vmatpush1.msra.mxu0 0.0
  %578 = vmatprep.subr.mxu0 0.0
  %579 = vmatpush1.msra.mxu0 0.0
  %580 = vmatprep.subr.mxu0 0.0
  %581 = vmatpush1.msra.mxu0 0.0
  %582 = vmatprep.subr.mxu0 0.0
  %583 = vmatpush1.msra.mxu0 0.0
  %584 = vmatprep.subr.mxu0 0.0
  %585 = vmatpush1.msra.mxu0 0.0
  %586 = vmatprep.subr.mxu0 0.0
  %587 = vmatpush1.msra.mxu0 0.0
  %588 = vmatprep.mubr.f32.mxu0 0.0
  %589 = vmatmul.mubr.f32.gmra.mrb[0].mxu0 %v501
  %v590 = vpop.f32.mrb[0].mxu0
  %v591 = vadd.f32 %v498, %v590
  %v592 = vpop.f32.mrb[0].mxu0
  %593 = vmatprep.mubr.f32.mxu0 0.0
  %594 = vmatmul.mubr.f32.gmra.mrb[0].mxu0 %v504
  %v595 = vpop.f32.mrb[0].mxu0
  %v596 = vadd.f32 %v498, %v595
  %v597 = vpop.f32.mrb[0].mxu0
  %598 = vmatprep.mubr.f32.mxu0 0.0
  %599 = vmatmul.mubr.f32.gmra.mrb[0].mxu0 %v507
  %v600 = vpop.f32.mrb[0].mxu0
  %v601 = vadd.f32 %v498, %v600
  %v602 = vpop.f32.mrb[0].mxu0
  %603 = vmatprep.mubr.f32.mxu0 0.0
  %604 = vmatmul.mubr.f32.gmra.mrb[0].mxu0 %v510
  %v605 = vpop.f32.mrb[0].mxu0
  %v606 = vadd.f32 %v498, %v605
  %v607 = vpop.f32.mrb[0].mxu0
  %608 = vmatprep.mubr.f32.mxu0 0.0
  %609 = vmatmul.mubr.f32.gmra.mrb[0].mxu0 %v513
  %v610 = vpop.f32.mrb[0].mxu0
  %v611 = vadd.f32 %v498, %v610
  %v612 = vpop.f32.mrb[0].mxu0
  %613 = vmatprep.mubr.f32.mxu0 0.0
  %614 = vmatmul.mubr.f32.gmra.mrb[0].mxu0 %v516
  %v615 = vpop.f32.mrb[0].mxu0
  %v616 = vadd.f32 %v498, %v615
  %v617 = vpop.f32.mrb[0].mxu0
  %618 = vmatprep.mubr.f32.mxu0 0.0
  %619 = vmatmul.mubr.f32.gmra.mrb[0].mxu0 %v519
  %v620 = vpop.f32.mrb[0].mxu0
  %v621 = vadd.f32 %v498, %v620
  %v622 = vpop.f32.mrb[0].mxu0
  %623 = vmatprep.mubr.f32.mxu0 0.0
  %624 = vmatmul.mubr.f32.gmra.mrb[0].mxu0 %v522
  %v625 = vpop.f32.mrb[0].mxu0
  %v626 = vadd.f32 %v498, %v625
  %v627 = vpop.f32.mrb[0].mxu0
  %628 = vdwg.mxu0
  %629 = vst.msk [vmem:[%s9] sm:$0xff] %vm50, %v591
  %630 = vst.msk [vmem:[%s9 + $0x8] sm:$0xff] %vm50, %v596
  %631 = vst.msk [vmem:[%s9 + $0x10] sm:$0xff] %vm50, %v601
  %632 = vst.msk [vmem:[%s9 + $0x18] sm:$0xff] %vm50, %v606
  %633 = vst.msk [vmem:[%s9 + $0x20] sm:$0xff] %vm50, %v611
  %634 = vst.msk [vmem:[%s9 + $0x28] sm:$0xff] %vm50, %v616
  %635 = vst.msk [vmem:[%s9 + $0x30] sm:$0xff] %vm50, %v621
  %636 = vst.msk [vmem:[%s9 + $0x38] sm:$0xff] %vm50, %v626
  // Predicated region
  $region38: #{tpu_custom_call.1} parent=0 // pred_check
    _
  $region39: #{tpu_custom_call.1} parent=0 // pred_check_branch
    %638 = sbr.rel (0) target = $region41
  $region40: #{tpu_custom_call.1} parent=0 // pred_region
    _
  $region41: #{tpu_custom_call.1} parent=0 // pred_fallthru
    _
  // Predicated region
  $region42: #{tpu_custom_call.1} parent=0 // pred_check
    _
  $region43: #{tpu_custom_call.1} parent=0 // pred_check_branch
    %640 = sbr.rel (0) target = $region45
  $region44: #{tpu_custom_call.1} parent=0 // pred_region
    _
  $region45: #{tpu_custom_call.1} parent=0 // pred_fallthru
    _

</llo_original>
